<compile_context>
chip_gen: v7x
topology: tpu7x:2x2x1
jax: 0.10.0
libtpu: 0.0.40
codegen_flags: <defaults>
</compile_context>

<pallas_src>
import functools

import jax
import jax.numpy as jnp
from jax.experimental import pallas as pl
from jax.experimental.pallas import tpu as pltpu


def _gru_cell_kernel(*refs, hidden, has_bias):
    """Fused GRU cell body (single grid point, everything resident in VMEM).

    has_bias=True : x (B,I), h (B,H), w_x (I,4H), w_h (H,4H), b (1,4H), o (B,H)
    has_bias=False: x (B,I), h (B,H), w_x (I,4H), w_h (H,4H),           o (B,H)

    The summed matmuls produce, along the 4H lane axis (=128 when H=32):
        [ gi_r+gh_r | gi_z+gh_z | gi_n | gh_n ]
    """
    if has_bias:
        x_ref, h_ref, wx_ref, wh_ref, b_ref, o_ref = refs
    else:
        x_ref, h_ref, wx_ref, wh_ref, o_ref = refs

    # Two MXU calls (same total K-work as one fused matmul), f32 accumulation.
    g = jnp.dot(x_ref[...], wx_ref[...], preferred_element_type=jnp.float32)
    g = g + jnp.dot(h_ref[...], wh_ref[...], preferred_element_type=jnp.float32)
    if has_bias:
        g = g + b_ref[...]      # fused bias: [b_ir+b_hr, b_iz+b_hz, b_in, b_hn]

    # One EUP pass for both sigmoids (64 lanes), then slice r / z out of it.
    rz = jax.nn.sigmoid(g[:, 0:2 * hidden])
    r = rz[:, 0:hidden]
    z = rz[:, hidden:2 * hidden]
    n = jnp.tanh(g[:, 2 * hidden:3 * hidden] + r * g[:, 3 * hidden:4 * hidden])

    # Blend with the ORIGINAL h (full precision), single cast at the store.
    h = h_ref[...].astype(jnp.float32)
    o_ref[...] = (n + z * (h - n)).astype(o_ref.dtype)


def build_gru_params(weight_ih, weight_hh, bias_ih=None, bias_hh=None):
    """Fold PyTorch-layout GRUCell params into two stacked weights (+ bias).

    weight_ih : (3H, I), weight_hh : (3H, H)  -- PyTorch row order [r, z, n].
    Returns (w_x, w_h, b_fused) with
        w_x : (I, 4H)  column blocks [W_ir^T, W_iz^T, W_in^T, 0]
        w_h : (H, 4H)  column blocks [W_hr^T, W_hz^T, 0,      W_hn^T]
        b_fused : (1, 4H)  [b_ir+b_hr, b_iz+b_hz, b_in, b_hn], or None.
    Call ONCE (outside any timestep loop) and reuse for every gru_cell_fused call.
    """
    three_h, input_size = weight_ih.shape
    hidden = three_h // 3

    w_ir, w_iz, w_in = jnp.split(weight_ih, 3, axis=0)   # each (H, I)
    w_hr, w_hz, w_hn = jnp.split(weight_hh, 3, axis=0)   # each (H, H)
    z_i = jnp.zeros((hidden, input_size), weight_ih.dtype)
    z_h = jnp.zeros((hidden, hidden), weight_hh.dtype)

    w_x = jnp.concatenate([w_ir, w_iz, w_in, z_i], axis=0).T   # (I, 4H)
    w_h = jnp.concatenate([w_hr, w_hz, z_h, w_hn], axis=0).T   # (H, 4H)

    b_fused = None
    if bias_ih is not None or bias_hh is not None:
        bih = (jnp.zeros((three_h,), jnp.float32) if bias_ih is None
               else bias_ih.astype(jnp.float32))
        bhh = (jnp.zeros((three_h,), jnp.float32) if bias_hh is None
               else bias_hh.astype(jnp.float32))
        b_ir, b_iz, b_in = jnp.split(bih, 3)
        b_hr, b_hz, b_hn = jnp.split(bhh, 3)
        b_fused = jnp.concatenate(
            [b_ir + b_hr, b_iz + b_hz, b_in, b_hn]).reshape(1, 4 * hidden)
    return w_x, w_h, b_fused


def gru_cell_fused(x, h, w_x, w_h, b_fused=None):
    """Pallas GRUCell forward using pre-stacked parameters.

    x : (B, I), h : (B, H), w_x : (I, 4H), w_h : (H, 4H), b_fused : (1, 4H)|None.
    Returns the new hidden state (B, H) in h.dtype (the carried-state dtype).
    """
    batch, input_size = x.shape
    hidden = h.shape[-1]
    four_h = 4 * hidden
    assert w_x.shape == (input_size, four_h)
    assert w_h.shape == (hidden, four_h)

    has_bias = b_fused is not None
    kernel = functools.partial(_gru_cell_kernel, hidden=hidden,
                               has_bias=has_bias)

    # Tiny problem: one full block per array, single grid point.
    full = lambda shape: pl.BlockSpec(shape, lambda: tuple(0 for _ in shape))

    in_specs = [full((batch, input_size)),
                full((batch, hidden)),
                full((input_size, four_h)),
                full((hidden, four_h))]
    operands = [x, h, w_x, w_h]
    if has_bias:
        in_specs.append(full((1, four_h)))
        operands.append(b_fused)

    return pl.pallas_call(
        kernel,
        out_shape=jax.ShapeDtypeStruct((batch, hidden), h.dtype),
        grid_spec=pltpu.PrefetchScalarGridSpec(
            num_scalar_prefetch=0,
            grid=(),
            in_specs=in_specs,
            out_specs=full((batch, hidden)),
        ),
    )(*operands)


def gru_cell(x, h, weight_ih, weight_hh, bias_ih=None, bias_hh=None):
    """Convenience wrapper matching the PyTorch parameter layout.

    For recurrent use, prefer build_gru_params() once + gru_cell_fused()
    per step so the weight stacking is not re-executed every timestep.
    """
    w_x, w_h, b_fused = build_gru_params(weight_ih, weight_hh,
                                         bias_ih, bias_hh)
    return gru_cell_fused(x, h, w_x, w_h, b_fused)


def _reference_gru_cell(x, h, weight_ih, weight_hh, bias_ih, bias_hh):
    """Pure-JAX reference matching torch.nn.GRUCell."""
    gi = x @ weight_ih.T + bias_ih
    gh = h @ weight_hh.T + bias_hh
    gi_r, gi_z, gi_n = jnp.split(gi, 3, axis=-1)
    gh_r, gh_z, gh_n = jnp.split(gh, 3, axis=-1)
    r = jax.nn.sigmoid(gi_r + gh_r)
    z = jax.nn.sigmoid(gi_z + gh_z)
    n = jnp.tanh(gi_n + r * gh_n)
    return (1.0 - z) * n + z * h


if __name__ == "__main__":
    # Shapes consistent with the module: batch=8, input=32, hidden=32.
    batch, input_size, hidden_size = 8, 32, 32

    key = jax.random.PRNGKey(0)
    k_x, k_h, k_wih, k_whh, k_bih, k_bhh = jax.random.split(key, 6)

    x = jax.random.normal(k_x, (batch, input_size), dtype=jnp.float32)
    h = jax.random.normal(k_h, (batch, hidden_size), dtype=jnp.float32)

    bound = 1.0 / jnp.sqrt(jnp.float32(hidden_size))
    weight_ih = jax.random.uniform(
        k_wih, (3 * hidden_size, input_size), minval=-bound, maxval=bound,
        dtype=jnp.float32)
    weight_hh = jax.random.uniform(
        k_whh, (3 * hidden_size, hidden_size), minval=-bound, maxval=bound,
        dtype=jnp.float32)

    # --- Module-faithful path: reset_parameters() zeroes both biases, so the
    # --- kernel runs the bias-free variant (no bias DMA, no bias adds).
    zeros_b = jnp.zeros((3 * hidden_size,), dtype=jnp.float32)
    w_x, w_h, _ = build_gru_params(weight_ih, weight_hh)   # hoisted, built once
    out = gru_cell_fused(x, h, w_x, w_h)                   # per-step call
    out = jax.block_until_ready(out)

    ref = _reference_gru_cell(x, h, weight_ih, weight_hh, zeros_b, zeros_b)
    assert out.shape == (batch, hidden_size)
    assert jnp.allclose(out, ref, atol=1e-5, rtol=1e-5), "mismatch (zero-bias path)"

    # --- Generality check: nonzero biases via the fused-bias path.
    bias_ih = jax.random.uniform(k_bih, (3 * hidden_size,), minval=-bound,
                                 maxval=bound, dtype=jnp.float32)
    bias_hh = jax.random.uniform(k_bhh, (3 * hidden_size,), minval=-bound,
                                 maxval=bound, dtype=jnp.float32)
    out_b = jax.block_until_ready(
        gru_cell(x, h, weight_ih, weight_hh, bias_ih, bias_hh))
    ref_b = _reference_gru_cell(x, h, weight_ih, weight_hh, bias_ih, bias_hh)
    assert jnp.allclose(out_b, ref_b, atol=1e-5, rtol=1e-5), "mismatch (bias path)"

    print("KERNEL_OK")
</pallas_src>

<mosaic_0001>
module attributes {stable_mosaic.version = 11 : i64} {
  func.func @_gru_cell_kernel(%arg0: memref<8x32xf32, #tpu.memory_space<vmem>>, %arg1: memref<8x32xf32, #tpu.memory_space<vmem>>, %arg2: memref<32x128xf32, #tpu.memory_space<vmem>>, %arg3: memref<32x128xf32, #tpu.memory_space<vmem>>, %arg4: memref<8x32xf32, #tpu.memory_space<vmem>>) attributes {dimension_semantics = [], scalar_prefetch = 0 : i64, scratch_operands = 0 : i64, tpu.core_type = #tpu.core_type<tc>} {
    %c0 = arith.constant 0 : index
    %c0_0 = arith.constant 0 : index
    %0 = vector.load %arg0[%c0, %c0_0] : memref<8x32xf32, #tpu.memory_space<vmem>>, vector<8x32xf32>
    %c0_1 = arith.constant 0 : index
    %c0_2 = arith.constant 0 : index
    %1 = vector.load %arg2[%c0_1, %c0_2] : memref<32x128xf32, #tpu.memory_space<vmem>>, vector<32x128xf32>
    %cst = arith.constant dense<0.000000e+00> : vector<8x128xf32>
    %2 = tpu.matmul %0, %1, %cst {dimension_numbers = #tpu.dot_dimension_numbers<[1], [0], [0], [1], [0, 0, 1, 1], [], []>} : vector<8x32xf32>, vector<32x128xf32>, vector<8x128xf32> -> vector<8x128xf32>
    %c0_3 = arith.constant 0 : index
    %c0_4 = arith.constant 0 : index
    %3 = vector.load %arg1[%c0_3, %c0_4] : memref<8x32xf32, #tpu.memory_space<vmem>>, vector<8x32xf32>
    %c0_5 = arith.constant 0 : index
    %c0_6 = arith.constant 0 : index
    %4 = vector.load %arg3[%c0_5, %c0_6] : memref<32x128xf32, #tpu.memory_space<vmem>>, vector<32x128xf32>
    %cst_7 = arith.constant dense<0.000000e+00> : vector<8x128xf32>
    %5 = tpu.matmul %3, %4, %cst_7 {dimension_numbers = #tpu.dot_dimension_numbers<[1], [0], [0], [1], [0, 0, 1, 1], [], []>} : vector<8x32xf32>, vector<32x128xf32>, vector<8x128xf32> -> vector<8x128xf32>
    %6 = arith.addf %2, %5 : vector<8x128xf32>
    %7 = vector.extract_strided_slice %6 {offsets = [0, 0], sizes = [8, 64], strides = [1, 1]} : vector<8x128xf32> to vector<8x64xf32>
    %8 = arith.negf %7 : vector<8x64xf32>
    %9 = math.exp %8 : vector<8x64xf32>
    %cst_8 = arith.constant 1.000000e+00 : f32
    %10 = vector.broadcast %cst_8 : f32 to vector<8x64xf32>
    %11 = arith.addf %10, %9 : vector<8x64xf32>
    %12 = arith.divf %10, %11 : vector<8x64xf32>
    %13 = vector.extract_strided_slice %12 {offsets = [0, 0], sizes = [8, 32], strides = [1, 1]} : vector<8x64xf32> to vector<8x32xf32>
    %14 = vector.extract_strided_slice %12 {offsets = [0, 32], sizes = [8, 32], strides = [1, 1]} : vector<8x64xf32> to vector<8x32xf32>
    %15 = vector.extract_strided_slice %6 {offsets = [0, 64], sizes = [8, 32], strides = [1, 1]} : vector<8x128xf32> to vector<8x32xf32>
    %16 = vector.extract_strided_slice %6 {offsets = [0, 96], sizes = [8, 32], strides = [1, 1]} : vector<8x128xf32> to vector<8x32xf32>
    %17 = arith.mulf %13, %16 : vector<8x32xf32>
    %18 = arith.addf %15, %17 : vector<8x32xf32>
    %19 = math.tanh %18 : vector<8x32xf32>
    %c0_9 = arith.constant 0 : index
    %c0_10 = arith.constant 0 : index
    %20 = vector.load %arg1[%c0_9, %c0_10] : memref<8x32xf32, #tpu.memory_space<vmem>>, vector<8x32xf32>
    %21 = arith.subf %20, %19 : vector<8x32xf32>
    %22 = arith.mulf %14, %21 : vector<8x32xf32>
    %23 = arith.addf %19, %22 : vector<8x32xf32>
    %c0_11 = arith.constant 0 : index
    %c0_12 = arith.constant 0 : index
    %24 = vector.load %arg4[%c0_11, %c0_12] : memref<8x32xf32, #tpu.memory_space<vmem>>, vector<8x32xf32>
    tpu.vector_store %arg4[%c0_11, %c0_12], %23 {strides = array<i32>} : memref<8x32xf32, #tpu.memory_space<vmem>>, vector<8x32xf32>,
    return
  }
}

</mosaic_0001>

<llo_original>
// kernel: tpu_custom_call.1
$region0: #{tpu_custom_call.1}
  #allocation0 [shape = 'u32[]', space=smem, size = 0x4, offset = 0x4, fixed_abs, tag = 'smem constant byte address 0x4 - core index']
  #allocation1 [shape = 'u32[144,128]{1,0:T(1,128)}', space=vmem, size = 0x12000, scoped, tag = 'internal scratch']
  %s0 = inlined_call_operand.hbm [shape: f32[8,32], index: 0, kind: input, shape index: {}]
  %s1 = inlined_call_operand.hbm [shape: f32[8,32], index: 1, kind: input, shape index: {}]
  %s2 = inlined_call_operand.hbm [shape: f32[32,128], index: 2, kind: input, shape index: {}]
  %s3 = inlined_call_operand.hbm [shape: f32[32,128], index: 3, kind: input, shape index: {}]
  %s4 = inlined_call_operand.hbm [shape: f32[8,32], index: 4, kind: output, shape index: {}]
  %s5 = sld [smem:[#allocation0]]
  $region42: #{tpu_custom_call.1} parent=0
    _
  %s7 = ssub.s32 1, %s5
  %s8 = scalar_select 0, %s7, %s5
  $region1: #{tpu_custom_call.1} parent=0
    #allocation2 [shape = 'u8[4096]{0}', space=vmem, size = 0x1000, scoped, tag = 'input window, operand 0, single buffered']
    #allocation3 [shape = 's32[1]{0}', space=sflag, size = 0x4, scoped, tag = 'scoped memory for tpu_custom_call.1']
    #allocation4 [shape = 's32[1]{0}', space=sflag, size = 0x4, scoped, tag = 'scoped memory for tpu_custom_call.1']
    #allocation5 [shape = 'u8[4096]{0}', space=vmem, size = 0x1000, scoped, tag = 'input window, operand 1, single buffered']
    #allocation6 [shape = 's32[1]{0}', space=sflag, size = 0x4, scoped, tag = 'scoped memory for tpu_custom_call.1']
    #allocation7 [shape = 'u8[16384]{0}', space=vmem, size = 0x4000, scoped, tag = 'input window, operand 2, single buffered']
    #allocation8 [shape = 'u8[16384]{0}', space=vmem, size = 0x4000, scoped, tag = 'input window, operand 3, single buffered']
    #allocation9 [shape = 's32[1]{0}', space=sflag, size = 0x4, scoped, tag = 'scoped memory for tpu_custom_call.1']
    #allocation10 [shape = 'u8[4096]{0}', space=vmem, size = 0x1000, scoped, tag = 'output window, operand 0, single buffered']
    %9 = vsyncpa [#allocation3], 0
    %10 = vsyncpa [#allocation6], 0
    %11 = vsyncpa [#allocation9], 0
    %12 = vsyncpa [#allocation4], 0
    // Predicated region
    $region2: #{tpu_custom_call.1} parent=1 // pred_check
      _
    $region3: #{tpu_custom_call.1} parent=1 // pred_check_branch
      %14 = sbr.rel (0) target = $region5
    $region4: #{tpu_custom_call.1} parent=1 // pred_region
      %s16 = ssub.s32 128, 128
      %17 = vsyncadd [#allocation3], %s16
      %s19 = sshll.u32 [#allocation2], 4
      %s20 = int_to_ptr.vmem [resolvable:$true] %s19
      %22 = dma.hbm_to_vmem [thread:$0]  %s0, 128, %s20, [#allocation3]
    $region5: #{tpu_custom_call.1} parent=1 // pred_fallthru
      _
    // Predicated region
    $region6: #{tpu_custom_call.1} parent=1 // pred_check
      _
    $region7: #{tpu_custom_call.1} parent=1 // pred_check_branch
      %24 = sbr.rel (0) target = $region9
    $region8: #{tpu_custom_call.1} parent=1 // pred_region
      %s26 = ssub.s32 128, 128
      %27 = vsyncadd [#allocation6], %s26
      %s29 = sshll.u32 [#allocation5], 4
      %s30 = int_to_ptr.vmem [resolvable:$true] %s29
      %32 = dma.hbm_to_vmem [thread:$0]  %s1, 128, %s30, [#allocation6]
    $region9: #{tpu_custom_call.1} parent=1 // pred_fallthru
      _
    // Predicated region
    $region10: #{tpu_custom_call.1} parent=1 // pred_check
      _
    $region11: #{tpu_custom_call.1} parent=1 // pred_check_branch
      %34 = sbr.rel (0) target = $region13
    $region12: #{tpu_custom_call.1} parent=1 // pred_region
      %s36 = ssub.s32 512, 512
      %37 = vsyncadd [#allocation6], %s36
      %s38 = sshll.u32 [#allocation7], 4
      %s39 = int_to_ptr.vmem [resolvable:$true] %s38
      %44 = dma.hbm_to_vmem [thread:$0]  %s2, 512, %s39, [#allocation6], 128, 128, 8
    $region13: #{tpu_custom_call.1} parent=1 // pred_fallthru
      _
    // Predicated region
    $region14: #{tpu_custom_call.1} parent=1 // pred_check
      _
    $region15: #{tpu_custom_call.1} parent=1 // pred_check_branch
      %46 = sbr.rel (0) target = $region17
    $region16: #{tpu_custom_call.1} parent=1 // pred_region
      %s48 = ssub.s32 512, 512
      %49 = vsyncadd [#allocation9], %s48
      %s50 = sshll.u32 [#allocation8], 4
      %s51 = int_to_ptr.vmem [resolvable:$true] %s50
      %56 = dma.hbm_to_vmem [thread:$0]  %s3, 512, %s51, [#allocation9], 128, 128, 8
    $region17: #{tpu_custom_call.1} parent=1 // pred_fallthru
      _
    // Predicated region
    $region18: #{tpu_custom_call.1} parent=1 // pred_check
      _
    $region19: #{tpu_custom_call.1} parent=1 // pred_check_branch
      %58 = sbr.rel (0) target = $region21
    $region20: #{tpu_custom_call.1} parent=1 // pred_region
      %59 = dma.done [#allocation3], 128
    $region21: #{tpu_custom_call.1} parent=1 // pred_fallthru
      _
    // Predicated region
    $region22: #{tpu_custom_call.1} parent=1 // pred_check
      _
    $region23: #{tpu_custom_call.1} parent=1 // pred_check_branch
      %61 = sbr.rel (0) target = $region25
    $region24: #{tpu_custom_call.1} parent=1 // pred_region
      %62 = dma.done [#allocation6], 128
    $region25: #{tpu_custom_call.1} parent=1 // pred_fallthru
      _
    // Predicated region
    $region26: #{tpu_custom_call.1} parent=1 // pred_check
      _
    $region27: #{tpu_custom_call.1} parent=1 // pred_check_branch
      %64 = sbr.rel (0) target = $region29
    $region28: #{tpu_custom_call.1} parent=1 // pred_region
      %65 = dma.done [#allocation6], 512
    $region29: #{tpu_custom_call.1} parent=1 // pred_fallthru
      _
    // Predicated region
    $region30: #{tpu_custom_call.1} parent=1 // pred_check
      _
    $region31: #{tpu_custom_call.1} parent=1 // pred_check_branch
      %67 = sbr.rel (0) target = $region33
    $region32: #{tpu_custom_call.1} parent=1 // pred_region
      %68 = dma.done [#allocation9], 512
    $region33: #{tpu_custom_call.1} parent=1 // pred_fallthru
      _
    %v69 = vld [vmem:[#allocation2] sm:$0xff]
    %v70 = vld [vmem:[#allocation7] sm:$0xff]
    %v71 = vld [vmem:[#allocation7 + $0x8] sm:$0xff]
    %v72 = vld [vmem:[#allocation7 + $0x10] sm:$0xff]
    %v73 = vld [vmem:[#allocation7 + $0x18] sm:$0xff]
    %v74 = vld [vmem:[#allocation5] sm:$0xff]
    %v75 = vld [vmem:[#allocation8] sm:$0xff]
    %v76 = vld [vmem:[#allocation8 + $0x8] sm:$0xff]
    %v77 = vld [vmem:[#allocation8 + $0x10] sm:$0xff]
    %v78 = vld [vmem:[#allocation8 + $0x18] sm:$0xff]
    %vm79 = vcmask 261120
    %v81 = vsel %vm79, %v74, 0
    %83 = vmatprep.subr.mxu0 0.0
    %84 = vmatpush1.msra.mxu0 %v75
    %85 = vmatprep.subr.mxu0 0.0
    %86 = vmatpush1.msra.mxu0 %v76
    %87 = vmatprep.subr.mxu0 0.0
    %88 = vmatpush1.msra.mxu0 %v77
    %89 = vmatprep.subr.mxu0 0.0
    %90 = vmatpush1.msra.mxu0 %v78
    %91 = vmatprep.subr.mxu0 0.0
    %92 = vmatpush1.msra.mxu0 0.0
    %93 = vmatprep.subr.mxu0 0.0
    %94 = vmatpush1.msra.mxu0 0.0
    %95 = vmatprep.subr.mxu0 0.0
    %96 = vmatpush1.msra.mxu0 0.0
    %97 = vmatprep.subr.mxu0 0.0
    %98 = vmatpush1.msra.mxu0 0.0
    %99 = vmatprep.subr.mxu0 0.0
    %100 = vmatpush1.msra.mxu0 0.0
    %101 = vmatprep.subr.mxu0 0.0
    %102 = vmatpush1.msra.mxu0 0.0
    %103 = vmatprep.subr.mxu0 0.0
    %104 = vmatpush1.msra.mxu0 0.0
    %105 = vmatprep.subr.mxu0 0.0
    %106 = vmatpush1.msra.mxu0 0.0
    %107 = vmatprep.subr.mxu0 0.0
    %108 = vmatpush1.msra.mxu0 0.0
    %109 = vmatprep.subr.mxu0 0.0
    %110 = vmatpush1.msra.mxu0 0.0
    %111 = vmatprep.subr.mxu0 0.0
    %112 = vmatpush1.msra.mxu0 0.0
    %113 = vmatprep.subr.mxu0 0.0
    %114 = vmatpush1.msra.mxu0 0.0
    %115 = vmatprep.subr.mxu0 0.0
    %116 = vmatpush1.msra.mxu0 0.0
    %117 = vmatprep.subr.mxu0 0.0
    %118 = vmatpush1.msra.mxu0 0.0
    %119 = vmatprep.subr.mxu0 0.0
    %120 = vmatpush1.msra.mxu0 0.0
    %121 = vmatprep.subr.mxu0 0.0
    %122 = vmatpush1.msra.mxu0 0.0
    %123 = vmatprep.subr.mxu0 0.0
    %124 = vmatpush1.msra.mxu0 0.0
    %125 = vmatprep.subr.mxu0 0.0
    %126 = vmatpush1.msra.mxu0 0.0
    %127 = vmatprep.subr.mxu0 0.0
    %128 = vmatpush1.msra.mxu0 0.0
    %129 = vmatprep.subr.mxu0 0.0
    %130 = vmatpush1.msra.mxu0 0.0
    %131 = vmatprep.subr.mxu0 0.0
    %132 = vmatpush1.msra.mxu0 0.0
    %133 = vmatprep.subr.mxu0 0.0
    %134 = vmatpush1.msra.mxu0 0.0
    %135 = vmatprep.subr.mxu0 0.0
    %136 = vmatpush1.msra.mxu0 0.0
    %137 = vmatprep.subr.mxu0 0.0
    %138 = vmatpush1.msra.mxu0 0.0
    %139 = vmatprep.subr.mxu0 0.0
    %140 = vmatpush1.msra.mxu0 0.0
    %141 = vmatprep.subr.mxu0 0.0
    %142 = vmatpush1.msra.mxu0 0.0
    %143 = vmatprep.subr.mxu0 0.0
    %144 = vmatpush1.msra.mxu0 0.0
    %145 = vmatprep.subr.mxu0 0.0
    %146 = vmatpush1.msra.mxu0 0.0
    %147 = vmatprep.mubr.f32.mxu0 0.0
    %148 = vmatmul.mubr.f32.gmra.mrb[0].mxu0 %v81
    %v149 = vpop.f32.mrb[0].mxu0
    %v150 = vadd.f32 0.0, %v149
    %v151 = vpop.f32.mrb[0].mxu0
    %152 = vdwg.mxu0
    %v154 = vsel %vm79, %v69, 0
    %156 = vmatprep.subr.mxu0 0.0
    %157 = vmatpush1.msra.mxu0 %v70
    %158 = vmatprep.subr.mxu0 0.0
    %159 = vmatpush1.msra.mxu0 %v71
    %160 = vmatprep.subr.mxu0 0.0
    %161 = vmatpush1.msra.mxu0 %v72
    %162 = vmatprep.subr.mxu0 0.0
    %163 = vmatpush1.msra.mxu0 %v73
    %164 = vmatprep.subr.mxu0 0.0
    %165 = vmatpush1.msra.mxu0 0.0
    %166 = vmatprep.subr.mxu0 0.0
    %167 = vmatpush1.msra.mxu0 0.0
    %168 = vmatprep.subr.mxu0 0.0
    %169 = vmatpush1.msra.mxu0 0.0
    %170 = vmatprep.subr.mxu0 0.0
    %171 = vmatpush1.msra.mxu0 0.0
    %172 = vmatprep.subr.mxu0 0.0
    %173 = vmatpush1.msra.mxu0 0.0
    %174 = vmatprep.subr.mxu0 0.0
    %175 = vmatpush1.msra.mxu0 0.0
    %176 = vmatprep.subr.mxu0 0.0
    %177 = vmatpush1.msra.mxu0 0.0
    %178 = vmatprep.subr.mxu0 0.0
    %179 = vmatpush1.msra.mxu0 0.0
    %180 = vmatprep.subr.mxu0 0.0
    %181 = vmatpush1.msra.mxu0 0.0
    %182 = vmatprep.subr.mxu0 0.0
    %183 = vmatpush1.msra.mxu0 0.0
    %184 = vmatprep.subr.mxu0 0.0
    %185 = vmatpush1.msra.mxu0 0.0
    %186 = vmatprep.subr.mxu0 0.0
    %187 = vmatpush1.msra.mxu0 0.0
    %188 = vmatprep.subr.mxu0 0.0
    %189 = vmatpush1.msra.mxu0 0.0
    %190 = vmatprep.subr.mxu0 0.0
    %191 = vmatpush1.msra.mxu0 0.0
    %192 = vmatprep.subr.mxu0 0.0
    %193 = vmatpush1.msra.mxu0 0.0
    %194 = vmatprep.subr.mxu0 0.0
    %195 = vmatpush1.msra.mxu0 0.0
    %196 = vmatprep.subr.mxu0 0.0
    %197 = vmatpush1.msra.mxu0 0.0
    %198 = vmatprep.subr.mxu0 0.0
    %199 = vmatpush1.msra.mxu0 0.0
    %200 = vmatprep.subr.mxu0 0.0
    %201 = vmatpush1.msra.mxu0 0.0
    %202 = vmatprep.subr.mxu0 0.0
    %203 = vmatpush1.msra.mxu0 0.0
    %204 = vmatprep.subr.mxu0 0.0
    %205 = vmatpush1.msra.mxu0 0.0
    %206 = vmatprep.subr.mxu0 0.0
    %207 = vmatpush1.msra.mxu0 0.0
    %208 = vmatprep.subr.mxu0 0.0
    %209 = vmatpush1.msra.mxu0 0.0
    %210 = vmatprep.subr.mxu0 0.0
    %211 = vmatpush1.msra.mxu0 0.0
    %212 = vmatprep.subr.mxu0 0.0
    %213 = vmatpush1.msra.mxu0 0.0
    %214 = vmatprep.subr.mxu0 0.0
    %215 = vmatpush1.msra.mxu0 0.0
    %216 = vmatprep.subr.mxu0 0.0
    %217 = vmatpush1.msra.mxu0 0.0
    %218 = vmatprep.subr.mxu0 0.0
    %219 = vmatpush1.msra.mxu0 0.0
    %220 = vmatprep.mubr.f32.mxu0 0.0
    %221 = vmatmul.mubr.f32.gmra.mrb[0].mxu0 %v154
    %v222 = vpop.f32.mrb[0].mxu0
    %v223 = vadd.f32 %v150, %v222
    %v224 = vpop.f32.mrb[0].mxu0
    %225 = vdwg.mxu0
    %v226 = vxor.u32 %v223, 2147483648
    %v227 = vmul.f32 %v226, 1.442695
    %v228 = vpow.pop %v227
    %v229 = vadd.f32 %v228, 1.0
    %v230 = vrcp.pop %v229
    %v231 = vmul.f32 1.0, %v230
    %233 = vrot.lane.b32.xlu0 %v223, 32
    %v234 = vpop.permute.xlu0 %233
    %v236 = vmul.f32 %v231, %v234
    %238 = vrot.lane.b32.xlu0 %v236, 64
    %v239 = vpop.permute.xlu0 %238
    %v241 = vadd.f32 %v223, %v239
    %v242 = vtanh.pop %v241
    %244 = vrot.lane.b32.xlu0 %v242, 64
    %v245 = vpop.permute.xlu0 %244
    %v247 = vsub.f32 %v74, %v245
    %249 = vrot.lane.b32.xlu0 %v247, 32
    %v250 = vpop.permute.xlu0 %249
    %v252 = vmul.f32 %v231, %v250
    %254 = vrot.lane.b32.xlu0 %v252, 32
    %v255 = vpop.permute.xlu0 %254
    %v257 = vadd.f32 %v242, %v255
    %259 = vrot.lane.b32.xlu0 %v257, 64
    %v260 = vpop.permute.xlu0 %259
    %262 = vst.msk [vmem:[#allocation10] sm:$0xff] %vm79, %v260
    // Predicated region
    $region34: #{tpu_custom_call.1} parent=1 // pred_check
      _
    $region35: #{tpu_custom_call.1} parent=1 // pred_check_branch
      %264 = sbr.rel (0) target = $region37
    $region36: #{tpu_custom_call.1} parent=1 // pred_region
      %s266 = ssub.s32 128, 128
      %267 = vsyncadd [#allocation4], %s266
      %s269 = sshll.u32 [#allocation10], 4
      %s270 = int_to_ptr.vmem [resolvable:$true] %s269
      %272 = dma.vmem_to_hbm [thread:$0]  %s270, 128, %s4, [#allocation4]
    $region37: #{tpu_custom_call.1} parent=1 // pred_fallthru
      _
    // Predicated region
    $region38: #{tpu_custom_call.1} parent=1 // pred_check
      _
    $region39: #{tpu_custom_call.1} parent=1 // pred_check_branch
      %274 = sbr.rel (0) target = $region41
    $region40: #{tpu_custom_call.1} parent=1 // pred_region
      %275 = dma.done [#allocation4], 128
    $region41: #{tpu_custom_call.1} parent=1 // pred_fallthru
      _
    %276 = vsyncpa [#allocation3], 1
    %277 = vsyncpa [#allocation6], 1
    %278 = vsyncpa [#allocation9], 1
    %279 = vsyncpa [#allocation4], 1

</llo_original>
